<compile_context>
chip_gen: v6e
topology: v6e:2x2x1
jax: 0.10.0
libtpu: 0.0.40
codegen_flags: <defaults>
</compile_context>

<pallas_src>
import functools
import math

import jax
import jax.numpy as jnp
from jax import lax
from jax.experimental import pallas as pl
from jax.experimental.pallas import tpu as pltpu


# bf16 MXU operands (native on v5e/v6e/v7x), f32 accumulation. The dx /
# deformable-threshold path is kept in f32 regardless of this setting.
MXU_DTYPE = jnp.bfloat16


# ----------------------------- fused kernel --------------------------------

def _attention_block_kernel(x_ref, wq_ref, woff_ref, b2_ref, wqkv_ref, bqkv_ref,
                            o_ref, *, seq_len, hidden, n_groups, window_size,
                            fuse_qkv):
    L, H, G = seq_len, hidden, n_groups
    d = H // G
    TB, _, Dv = x_ref.shape
    mxu_dtype = wqkv_ref.dtype

    # ---- flatten the packed batches for the (batch-independent) projections
    x = x_ref[...].reshape(TB * L, Dv)                       # (TB*L, Dv) f32

    # ---- dx path, fully f32 (exact: protects the hard mask threshold) ------
    # xq = x @ Wq^T ; dx = sigmoid(relu(xq) @ (Wop^T W2^T) + b2) * L
    xq = jnp.dot(x, wq_ref[...], preferred_element_type=jnp.float32)   # (TB*L, H)
    h = jnp.maximum(xq, 0.0)
    z = jnp.dot(h, woff_ref[...], preferred_element_type=jnp.float32) + b2_ref[...]
    dx = (jax.nn.sigmoid(z) * jnp.float32(L)).reshape(TB, L, 1)        # (TB, L, 1)

    # ---- fused qkv projection (bf16 operands, f32 accumulation) ------------
    src = x if fuse_qkv else xq      # fuse_qkv: qkv = x @ (Wq^T Wqkv^T) + b
    qkv = jnp.dot(src.astype(mxu_dtype), wqkv_ref[...],
                  preferred_element_type=jnp.float32) + bqkv_ref[...]  # (TB*L, 3H)
    qkv = qkv.reshape(TB, L, 3 * H)
    q = qkv[:, :, 0 * H:1 * H].astype(mxu_dtype)
    k = qkv[:, :, 1 * H:2 * H].astype(mxu_dtype)
    v = qkv[:, :, 2 * H:3 * H].astype(mxu_dtype)

    # ---- mask predicate from iotas (no f32 1e18 mask materialized) ---------
    row = lax.broadcasted_iota(jnp.int32, (1, L, L), 1)
    col = lax.broadcasted_iota(jnp.int32, (1, L, L), 2)
    lower = col < row                                        # j < i: always masked
    diff = (col - row).astype(jnp.float32)                   # |i-j| for j >= i

    inv_sqrt_l = jnp.float32(1.0 / math.sqrt(L))             # torch: / np.sqrt(K=L)

    # ---- per head-group: compute + store directly (bounds live ranges) -----
    for g in range(G):
        sl = slice(g * d, (g + 1) * d)
        s = jnp.einsum("bqc,bkc->bqk", q[:, :, sl], k[:, :, sl],
                       preferred_element_type=jnp.float32) * inv_sqrt_l  # (TB,L,L)
        dxg = dx + jnp.float32(window_size[g])                           # (TB,L,1)
        masked = lower | (diff > dxg)                                    # (TB,L,L)
        # deformableAttn: masked_fill(win_mask > dx, -1e18) + attn, folded into
        # a single select (masked -> s - 1e18, unmasked -> 2*s; per source).
        s = jnp.where(masked, s - jnp.float32(1e18), s + s)
        s = s - jnp.max(s, axis=-1, keepdims=True)
        e = jnp.exp(s)
        denom = jnp.sum(e, axis=-1, keepdims=True)
        out_g = jnp.einsum("bqk,bkc->bqc", e.astype(mxu_dtype), v[:, :, sl],
                           preferred_element_type=jnp.float32)           # (TB,L,d)
        o_ref[:, :, sl] = (out_g * pl.reciprocal(denom, approx=False)
                           ).astype(o_ref.dtype)


# ------------------------------- wrapper ------------------------------------

def prepare_params(params, mxu_dtype=MXU_DTYPE):
    """One-time weight prep (transposes + exact algebraic fusions).

    Done OUTSIDE the jitted forward so the per-call path carries no
    batch-independent transposes / fusions.
    """
    f32 = jnp.float32
    H, Dv = params["Wq"].shape
    wq_t = params["Wq"].T.astype(f32)                                   # (Dv, H)
    # fold offset predictor (no nonlinearity between the two linears):
    w_off = params["Wop"].T.astype(f32) @ params["W2"].T.astype(f32)    # (H, 1)
    b2 = params["b2"].reshape(1, 1).astype(f32)
    if Dv < H:
        # fold Query into qkv: (x @ Wq^T) @ Wqkv^T == x @ (Wq^T @ Wqkv^T)
        w_qkv = params["Wq"].T.astype(f32) @ params["Wqkv"].T.astype(f32)  # (Dv, 3H)
    else:
        w_qkv = params["Wqkv"].T.astype(f32)                               # (H, 3H)
    return {
        "Wq_t": wq_t,
        "Woff": w_off,
        "b2": b2,
        "Wqkv_f": w_qkv.astype(mxu_dtype),
        "bqkv": params["bqkv"].reshape(1, -1).astype(f32),
    }


def _pick_tb(B, L):
    """Batches packed per program: largest divisor of B with TB*L <= 512 rows.
    Flattening (TB, L, .) -> (TB*L, .) needs sublane-aligned L when TB > 1."""
    if L % 8 != 0:
        return 1
    tb = 1
    for cand in range(1, B + 1):
        if B % cand == 0 and cand * L <= 512:
            tb = cand
    return tb


def attention_block_forward(x, prepared, window_size):
    """AttentionBlock.forward (attn_type='full', kv=None), fully fused."""
    B, L, Dv = x.shape
    H = prepared["Wq_t"].shape[1]
    G = len(window_size)
    assert H % G == 0, "hidden_size must divide evenly into window groups"

    TB = _pick_tb(B, L)
    fuse_qkv = Dv < H               # matches prepare_params' static decision

    kern = functools.partial(
        _attention_block_kernel,
        seq_len=L, hidden=H, n_groups=G,
        window_size=tuple(float(w) for w in window_size),
        fuse_qkv=fuse_qkv)

    def _const_spec(shape):
        # whole-array block, constant index_map -> fetched once, VMEM-resident.
        # TODO(synk): pipeline_mode=pl.Buffered(1) here halves the invariant-
        # weight VMEM footprint (matters on v7x's 64 MiB at production sizes).
        return pl.BlockSpec(shape, lambda b: (0,) * len(shape))

    return pl.pallas_call(
        kern,
        out_shape=jax.ShapeDtypeStruct((B, L, H), jnp.float32),
        grid=(B // TB,),
        in_specs=[
            pl.BlockSpec((TB, L, Dv), lambda b: (b, 0, 0)),  # TB batches / program
            _const_spec(prepared["Wq_t"].shape),
            _const_spec(prepared["Woff"].shape),
            _const_spec(prepared["b2"].shape),
            _const_spec(prepared["Wqkv_f"].shape),
            _const_spec(prepared["bqkv"].shape),
        ],
        out_specs=pl.BlockSpec((TB, L, H), lambda b: (b, 0, 0)),
        compiler_params=pltpu.CompilerParams(
            dimension_semantics=("parallel",),
            vmem_limit_bytes=48 * 1024 * 1024),   # above default scoped limit on all gens
    )(x.astype(jnp.float32), prepared["Wq_t"], prepared["Woff"], prepared["b2"],
      prepared["Wqkv_f"], prepared["bqkv"])


# ------------------------------- model glue ---------------------------------

# TODO(synk): Key/Value projection weights of AttentionBlock are dead code in
# the original forward (MultiHeadAttention ignores its key/value args), and
# learnedvector's wh_bias nn.Parameter side effect has no output effect, so
# neither is instantiated or computed here.
def init_params(key, dim_val, dim_attn, learneddim, hidden_size):
    assert dim_attn == hidden_size, "torch qkv reshape requires dim_attn == hidden_size"
    ks = jax.random.split(key, 6)
    s = 0.1
    return {
        "Wq":   s * jax.random.normal(ks[0], (dim_attn, dim_val), jnp.float32),
        "Wqkv": s * jax.random.normal(ks[1], (3 * hidden_size, hidden_size), jnp.float32),
        "bqkv": s * jax.random.normal(ks[2], (3 * hidden_size,), jnp.float32),
        "Wop":  s * jax.random.normal(ks[3], (learneddim, hidden_size), jnp.float32),
        "W2":   s * jax.random.normal(ks[4], (1, learneddim), jnp.float32),
        "b2":   s * jax.random.normal(ks[5], (1,), jnp.float32),
    }


def reference(x, p, window_size):
    """Pure-JAX reference matching the PyTorch forward, for verification."""
    B, L, Dv = x.shape
    H = p["Wq"].shape[0]
    G = len(window_size)
    d = H // G
    xq = x @ p["Wq"].T
    dx = jax.nn.sigmoid(jnp.maximum(xq, 0.0) @ p["Wop"].T @ p["W2"].T + p["b2"]) * L
    qkv = (xq @ p["Wqkv"].T + p["bqkv"]).reshape(B, L, 3, H).transpose(2, 0, 1, 3)
    i = jnp.arange(L)[:, None]
    j = jnp.arange(L)[None, :]
    mask = jnp.where(j < i, 1e18, jnp.abs(i - j)).astype(jnp.float32)
    outs = []
    for g in range(G):
        sl = slice(g * d, (g + 1) * d)
        q, k, v = qkv[0, ..., sl], qkv[1, ..., sl], qkv[2, ..., sl]
        dxg = dx + window_size[g]
        s = jnp.einsum("bld,bmd->blm", q, k) / jnp.float32(math.sqrt(L))
        s = jnp.where(mask[None] > dxg, jnp.float32(-1e18), s) + s
        s = jax.nn.softmax(s, axis=-1)
        outs.append(jnp.einsum("blm,bmd->bld", s, v))
    return jnp.concatenate(outs, -1)


if __name__ == "__main__":
    B, L = 2, 8
    dim_val = 16
    hidden_size = 32
    dim_attn = hidden_size          # required by the torch reshape in MHA.forward
    learneddim = 8
    window_size = [2, 4]            # 2 groups -> per-group head dim 16

    key = jax.random.PRNGKey(0)
    kx, kp = jax.random.split(key)
    x = jax.random.normal(kx, (B, L, dim_val), jnp.float32)
    params = init_params(kp, dim_val, dim_attn, learneddim, hidden_size)
    prepared = prepare_params(params)          # one-time weight prep, outside jit

    fn = jax.jit(functools.partial(attention_block_forward,
                                   window_size=tuple(window_size)))
    out = jax.block_until_ready(fn(x, prepared))

    ref = reference(x, params, window_size)
    assert out.shape == (B, L, hidden_size), out.shape
    max_err = float(jnp.max(jnp.abs(out - ref)))
    # bf16 MXU operands (f32 accumulation) against an all-f32 reference.
    assert jnp.allclose(out, ref, rtol=2e-2, atol=2e-2), f"max_err={max_err}"
    print("KERNEL_OK")
</pallas_src>

<mosaic_0001>
module attributes {stable_mosaic.version = 11 : i64} {
  func.func @_attention_block_kernel(%arg0: i32, %arg1: memref<2x8x16xf32, #tpu.memory_space<vmem>>, %arg2: memref<16x32xf32, #tpu.memory_space<vmem>>, %arg3: memref<32x1xf32, #tpu.memory_space<vmem>>, %arg4: memref<1x1xf32, #tpu.memory_space<vmem>>, %arg5: memref<16x96xbf16, #tpu.memory_space<vmem>>, %arg6: memref<1x96xf32, #tpu.memory_space<vmem>>, %arg7: memref<2x8x32xf32, #tpu.memory_space<vmem>>) attributes {dimension_semantics = [#tpu.dimension_semantics<parallel>], iteration_bounds = array<i64: 1>, scalar_prefetch = 0 : i64, scratch_operands = 0 : i64, tpu.core_type = #tpu.core_type<tc>, window_params = [{transform_indices = @transform_0, window_bounds = array<i64: 2, 8, 16>}, {pipeline_mode = #tpu.pipeline_mode<synchronous>, transform_indices = @transform_1, window_bounds = array<i64: 16, 32>}, {pipeline_mode = #tpu.pipeline_mode<synchronous>, transform_indices = @transform_2, window_bounds = array<i64: 32, 1>}, {pipeline_mode = #tpu.pipeline_mode<synchronous>, transform_indices = @transform_3, window_bounds = array<i64: 1, 1>}, {pipeline_mode = #tpu.pipeline_mode<synchronous>, transform_indices = @transform_4, window_bounds = array<i64: 16, 96>}, {pipeline_mode = #tpu.pipeline_mode<synchronous>, transform_indices = @transform_5, window_bounds = array<i64: 1, 96>}, {transform_indices = @transform_6, window_bounds = array<i64: 2, 8, 32>}]} {
    %c0 = arith.constant 0 : index
    %c0_0 = arith.constant 0 : index
    %c0_1 = arith.constant 0 : index
    %0 = vector.load %arg1[%c0, %c0_0, %c0_1] : memref<2x8x16xf32, #tpu.memory_space<vmem>>, vector<2x8x16xf32>
    %1 = vector.shape_cast %0 : vector<2x8x16xf32> to vector<16x16xf32>
    %c0_2 = arith.constant 0 : index
    %c0_3 = arith.constant 0 : index
    %2 = vector.load %arg2[%c0_2, %c0_3] : memref<16x32xf32, #tpu.memory_space<vmem>>, vector<16x32xf32>
    %cst = arith.constant dense<0.000000e+00> : vector<16x32xf32>
    %3 = tpu.matmul %1, %2, %cst {dimension_numbers = #tpu.dot_dimension_numbers<[1], [0], [0], [1], [0, 0, 1, 1], [], []>} : vector<16x16xf32>, vector<16x32xf32>, vector<16x32xf32> -> vector<16x32xf32>
    %cst_4 = arith.constant 0.000000e+00 : f32
    %4 = vector.broadcast %cst_4 : f32 to vector<16x32xf32>
    %5 = arith.maximumf %3, %4 : vector<16x32xf32>
    %c0_5 = arith.constant 0 : index
    %c0_6 = arith.constant 0 : index
    %6 = vector.load %arg3[%c0_5, %c0_6] : memref<32x1xf32, #tpu.memory_space<vmem>>, vector<32x1xf32>
    %cst_7 = arith.constant dense<0.000000e+00> : vector<16x1xf32>
    %7 = tpu.matmul %5, %6, %cst_7 {dimension_numbers = #tpu.dot_dimension_numbers<[1], [0], [0], [1], [0, 0, 1, 1], [], []>} : vector<16x32xf32>, vector<32x1xf32>, vector<16x1xf32> -> vector<16x1xf32>
    %c0_8 = arith.constant 0 : index
    %c0_9 = arith.constant 0 : index
    %8 = vector.load %arg4[%c0_8, %c0_9] : memref<1x1xf32, #tpu.memory_space<vmem>>, vector<1x1xf32>
    %9 = vector.broadcast %8 : vector<1x1xf32> to vector<16x1xf32>
    %10 = arith.addf %7, %9 : vector<16x1xf32>
    %11 = arith.negf %10 : vector<16x1xf32>
    %12 = math.exp %11 : vector<16x1xf32>
    %cst_10 = arith.constant 1.000000e+00 : f32
    %13 = vector.broadcast %cst_10 : f32 to vector<16x1xf32>
    %14 = arith.addf %13, %12 : vector<16x1xf32>
    %15 = arith.divf %13, %14 : vector<16x1xf32>
    %cst_11 = arith.constant 8.000000e+00 : f32
    %16 = vector.broadcast %cst_11 : f32 to vector<16x1xf32>
    %17 = arith.mulf %15, %16 : vector<16x1xf32>
    %18 = vector.shape_cast %17 : vector<16x1xf32> to vector<2x8x1xf32>
    %19 = arith.truncf %1 : vector<16x16xf32> to vector<16x16xbf16>
    %c0_12 = arith.constant 0 : index
    %c0_13 = arith.constant 0 : index
    %20 = vector.load %arg5[%c0_12, %c0_13] : memref<16x96xbf16, #tpu.memory_space<vmem>>, vector<16x96xbf16>
    %cst_14 = arith.constant dense<0.000000e+00> : vector<16x96xf32>
    %21 = tpu.matmul %19, %20, %cst_14 {dimension_numbers = #tpu.dot_dimension_numbers<[1], [0], [0], [1], [0, 0, 1, 1], [], []>} : vector<16x16xbf16>, vector<16x96xbf16>, vector<16x96xf32> -> vector<16x96xf32>
    %c0_15 = arith.constant 0 : index
    %c0_16 = arith.constant 0 : index
    %22 = vector.load %arg6[%c0_15, %c0_16] : memref<1x96xf32, #tpu.memory_space<vmem>>, vector<1x96xf32>
    %23 = vector.broadcast %22 : vector<1x96xf32> to vector<16x96xf32>
    %24 = arith.addf %21, %23 : vector<16x96xf32>
    %25 = vector.shape_cast %24 : vector<16x96xf32> to vector<2x8x96xf32>
    %26 = vector.extract_strided_slice %25 {offsets = [0, 0, 0], sizes = [2, 8, 32], strides = [1, 1, 1]} : vector<2x8x96xf32> to vector<2x8x32xf32>
    %27 = arith.truncf %26 : vector<2x8x32xf32> to vector<2x8x32xbf16>
    %28 = vector.extract_strided_slice %25 {offsets = [0, 0, 32], sizes = [2, 8, 32], strides = [1, 1, 1]} : vector<2x8x96xf32> to vector<2x8x32xf32>
    %29 = arith.truncf %28 : vector<2x8x32xf32> to vector<2x8x32xbf16>
    %30 = vector.extract_strided_slice %25 {offsets = [0, 0, 64], sizes = [2, 8, 32], strides = [1, 1, 1]} : vector<2x8x96xf32> to vector<2x8x32xf32>
    %31 = arith.truncf %30 : vector<2x8x32xf32> to vector<2x8x32xbf16>
    %32 = tpu.iota {dimensions = array<i32: 1>} : vector<1x8x8xi32>
    %33 = tpu.iota {dimensions = array<i32: 2>} : vector<1x8x8xi32>
    %34 = arith.cmpi slt, %33, %32 : vector<1x8x8xi32>
    %35 = arith.subi %33, %32 : vector<1x8x8xi32>
    %36 = arith.sitofp %35 : vector<1x8x8xi32> to vector<1x8x8xf32>
    %37 = vector.extract_strided_slice %27 {offsets = [0, 0, 0], sizes = [2, 8, 16], strides = [1, 1, 1]} : vector<2x8x32xbf16> to vector<2x8x16xbf16>
    %38 = vector.extract_strided_slice %29 {offsets = [0, 0, 0], sizes = [2, 8, 16], strides = [1, 1, 1]} : vector<2x8x32xbf16> to vector<2x8x16xbf16>
    "tpu.trace_start"() <{level = 10 : i32, message = "bqc,bkc->bqk"}> : () -> ()
    %cst_17 = arith.constant dense<0.000000e+00> : vector<2x8x8xf32>
    %39 = tpu.matmul %37, %38, %cst_17 {dimension_numbers = #tpu.dot_dimension_numbers<[2], [2], [1], [1], [0, 0, 0, 1, 1, 1], [0], [0]>} : vector<2x8x16xbf16>, vector<2x8x16xbf16>, vector<2x8x8xf32> -> vector<2x8x8xf32>
    "tpu.trace_stop"() : () -> ()
    %cst_18 = arith.constant 0.353553385 : f32
    %40 = vector.broadcast %cst_18 : f32 to vector<2x8x8xf32>
    %41 = arith.mulf %39, %40 : vector<2x8x8xf32>
    %cst_19 = arith.constant 2.000000e+00 : f32
    %42 = vector.broadcast %cst_19 : f32 to vector<2x8x1xf32>
    %43 = arith.addf %18, %42 : vector<2x8x1xf32>
    %44 = vector.broadcast %36 : vector<1x8x8xf32> to vector<2x8x8xf32>
    %45 = vector.broadcast %43 : vector<2x8x1xf32> to vector<2x8x8xf32>
    %46 = arith.cmpf ogt, %44, %45 : vector<2x8x8xf32>
    %47 = vector.broadcast %34 : vector<1x8x8xi1> to vector<2x8x8xi1>
    %48 = arith.ori %47, %46 : vector<2x8x8xi1>
    %cst_20 = arith.constant 9.99999984E+17 : f32
    %49 = vector.broadcast %cst_20 : f32 to vector<2x8x8xf32>
    %50 = arith.subf %41, %49 : vector<2x8x8xf32>
    %51 = arith.addf %41, %41 : vector<2x8x8xf32>
    %52 = arith.select %48, %50, %51 : vector<2x8x8xi1>, vector<2x8x8xf32>
    %cst_21 = arith.constant dense<0xFF800000> : vector<2x8xf32>
    %53 = vector.multi_reduction <maximumf>, %52, %cst_21 [2] : vector<2x8x8xf32> to vector<2x8xf32>
    %54 = vector.shape_cast %53 : vector<2x8xf32> to vector<2x8x1xf32>
    %55 = vector.broadcast %54 : vector<2x8x1xf32> to vector<2x8x8xf32>
    %56 = arith.subf %52, %55 : vector<2x8x8xf32>
    %57 = math.exp %56 : vector<2x8x8xf32>
    %cst_22 = arith.constant dense<0.000000e+00> : vector<2x8xf32>
    %58 = vector.multi_reduction <add>, %57, %cst_22 [2] : vector<2x8x8xf32> to vector<2x8xf32>
    %59 = vector.shape_cast %58 : vector<2x8xf32> to vector<2x8x1xf32>
    %60 = arith.truncf %57 : vector<2x8x8xf32> to vector<2x8x8xbf16>
    %61 = vector.extract_strided_slice %31 {offsets = [0, 0, 0], sizes = [2, 8, 16], strides = [1, 1, 1]} : vector<2x8x32xbf16> to vector<2x8x16xbf16>
    "tpu.trace_start"() <{level = 10 : i32, message = "bqk,bkc->bqc"}> : () -> ()
    %cst_23 = arith.constant dense<0.000000e+00> : vector<2x8x16xf32>
    %62 = tpu.matmul %60, %61, %cst_23 {dimension_numbers = #tpu.dot_dimension_numbers<[2], [1], [1], [2], [0, 0, 0, 1, 1, 2], [0], [0]>} : vector<2x8x8xbf16>, vector<2x8x16xbf16>, vector<2x8x16xf32> -> vector<2x8x16xf32>
    "tpu.trace_stop"() : () -> ()
    %63 = tpu.reciprocal %59 : vector<2x8x1xf32> -> vector<2x8x1xf32>
    %64 = vector.broadcast %63 : vector<2x8x1xf32> to vector<2x8x16xf32>
    %65 = arith.mulf %62, %64 : vector<2x8x16xf32>
    %c0_24 = arith.constant 0 : index
    %c0_25 = arith.constant 0 : index
    %c0_26 = arith.constant 0 : index
    %66 = vector.load %arg7[%c0_24, %c0_25, %c0_26] : memref<2x8x32xf32, #tpu.memory_space<vmem>>, vector<2x8x16xf32>
    tpu.vector_store %arg7[%c0_24, %c0_25, %c0_26], %65 {strides = array<i32>} : memref<2x8x32xf32, #tpu.memory_space<vmem>>, vector<2x8x16xf32>,
    %67 = vector.extract_strided_slice %27 {offsets = [0, 0, 16], sizes = [2, 8, 16], strides = [1, 1, 1]} : vector<2x8x32xbf16> to vector<2x8x16xbf16>
    %68 = vector.extract_strided_slice %29 {offsets = [0, 0, 16], sizes = [2, 8, 16], strides = [1, 1, 1]} : vector<2x8x32xbf16> to vector<2x8x16xbf16>
    "tpu.trace_start"() <{level = 10 : i32, message = "bqc,bkc->bqk"}> : () -> ()
    %cst_27 = arith.constant dense<0.000000e+00> : vector<2x8x8xf32>
    %69 = tpu.matmul %67, %68, %cst_27 {dimension_numbers = #tpu.dot_dimension_numbers<[2], [2], [1], [1], [0, 0, 0, 1, 1, 1], [0], [0]>} : vector<2x8x16xbf16>, vector<2x8x16xbf16>, vector<2x8x8xf32> -> vector<2x8x8xf32>
    "tpu.trace_stop"() : () -> ()
    %cst_28 = arith.constant 0.353553385 : f32
    %70 = vector.broadcast %cst_28 : f32 to vector<2x8x8xf32>
    %71 = arith.mulf %69, %70 : vector<2x8x8xf32>
    %cst_29 = arith.constant 4.000000e+00 : f32
    %72 = vector.broadcast %cst_29 : f32 to vector<2x8x1xf32>
    %73 = arith.addf %18, %72 : vector<2x8x1xf32>
    %74 = vector.broadcast %36 : vector<1x8x8xf32> to vector<2x8x8xf32>
    %75 = vector.broadcast %73 : vector<2x8x1xf32> to vector<2x8x8xf32>
    %76 = arith.cmpf ogt, %74, %75 : vector<2x8x8xf32>
    %77 = vector.broadcast %34 : vector<1x8x8xi1> to vector<2x8x8xi1>
    %78 = arith.ori %77, %76 : vector<2x8x8xi1>
    %cst_30 = arith.constant 9.99999984E+17 : f32
    %79 = vector.broadcast %cst_30 : f32 to vector<2x8x8xf32>
    %80 = arith.subf %71, %79 : vector<2x8x8xf32>
    %81 = arith.addf %71, %71 : vector<2x8x8xf32>
    %82 = arith.select %78, %80, %81 : vector<2x8x8xi1>, vector<2x8x8xf32>
    %cst_31 = arith.constant dense<0xFF800000> : vector<2x8xf32>
    %83 = vector.multi_reduction <maximumf>, %82, %cst_31 [2] : vector<2x8x8xf32> to vector<2x8xf32>
    %84 = vector.shape_cast %83 : vector<2x8xf32> to vector<2x8x1xf32>
    %85 = vector.broadcast %84 : vector<2x8x1xf32> to vector<2x8x8xf32>
    %86 = arith.subf %82, %85 : vector<2x8x8xf32>
    %87 = math.exp %86 : vector<2x8x8xf32>
    %cst_32 = arith.constant dense<0.000000e+00> : vector<2x8xf32>
    %88 = vector.multi_reduction <add>, %87, %cst_32 [2] : vector<2x8x8xf32> to vector<2x8xf32>
    %89 = vector.shape_cast %88 : vector<2x8xf32> to vector<2x8x1xf32>
    %90 = arith.truncf %87 : vector<2x8x8xf32> to vector<2x8x8xbf16>
    %91 = vector.extract_strided_slice %31 {offsets = [0, 0, 16], sizes = [2, 8, 16], strides = [1, 1, 1]} : vector<2x8x32xbf16> to vector<2x8x16xbf16>
    "tpu.trace_start"() <{level = 10 : i32, message = "bqk,bkc->bqc"}> : () -> ()
    %cst_33 = arith.constant dense<0.000000e+00> : vector<2x8x16xf32>
    %92 = tpu.matmul %90, %91, %cst_33 {dimension_numbers = #tpu.dot_dimension_numbers<[2], [1], [1], [2], [0, 0, 0, 1, 1, 2], [0], [0]>} : vector<2x8x8xbf16>, vector<2x8x16xbf16>, vector<2x8x16xf32> -> vector<2x8x16xf32>
    "tpu.trace_stop"() : () -> ()
    %93 = tpu.reciprocal %89 : vector<2x8x1xf32> -> vector<2x8x1xf32>
    %94 = vector.broadcast %93 : vector<2x8x1xf32> to vector<2x8x16xf32>
    %95 = arith.mulf %92, %94 : vector<2x8x16xf32>
    %c0_34 = arith.constant 0 : index
    %c0_35 = arith.constant 0 : index
    %c16 = arith.constant 16 : index
    %96 = vector.load %arg7[%c0_34, %c0_35, %c16] : memref<2x8x32xf32, #tpu.memory_space<vmem>>, vector<2x8x16xf32>
    tpu.vector_store %arg7[%c0_34, %c0_35, %c16], %95 {strides = array<i32>} : memref<2x8x32xf32, #tpu.memory_space<vmem>>, vector<2x8x16xf32>,
    return
  }
  func.func @transform_0(%arg0: i32) -> (i32, i32, i32) {
    %c0_i32 = arith.constant 0 : i32
    %c0_i32_0 = arith.constant 0 : i32
    %c0_i32_1 = arith.constant 0 : i32
    return %arg0, %c0_i32, %c0_i32_0 : i32, i32, i32
  }
  func.func @transform_1(%arg0: i32) -> (i32, i32) {
    %c0_i32 = arith.constant 0 : i32
    %c0_i32_0 = arith.constant 0 : i32
    %c0_i32_1 = arith.constant 0 : i32
    return %c0_i32, %c0_i32_0 : i32, i32
  }
  func.func @transform_2(%arg0: i32) -> (i32, i32) {
    %c0_i32 = arith.constant 0 : i32
    %c0_i32_0 = arith.constant 0 : i32
    %c0_i32_1 = arith.constant 0 : i32
    return %c0_i32, %c0_i32_0 : i32, i32
  }
  func.func @transform_3(%arg0: i32) -> (i32, i32) {
    %c0_i32 = arith.constant 0 : i32
    %c0_i32_0 = arith.constant 0 : i32
    %c0_i32_1 = arith.constant 0 : i32
    return %c0_i32, %c0_i32_0 : i32, i32
  }
  func.func @transform_4(%arg0: i32) -> (i32, i32) {
    %c0_i32 = arith.constant 0 : i32
    %c0_i32_0 = arith.constant 0 : i32
    %c0_i32_1 = arith.constant 0 : i32
    return %c0_i32, %c0_i32_0 : i32, i32
  }
  func.func @transform_5(%arg0: i32) -> (i32, i32) {
    %c0_i32 = arith.constant 0 : i32
    %c0_i32_0 = arith.constant 0 : i32
    %c0_i32_1 = arith.constant 0 : i32
    return %c0_i32, %c0_i32_0 : i32, i32
  }
  func.func @transform_6(%arg0: i32) -> (i32, i32, i32) {
    %c0_i32 = arith.constant 0 : i32
    %c0_i32_0 = arith.constant 0 : i32
    %c0_i32_1 = arith.constant 0 : i32
    return %arg0, %c0_i32, %c0_i32_0 : i32, i32, i32
  }
}

</mosaic_0001>

<llo_original>
// kernel: attention_block_forward.1
$region0: #{attention_block_forward.1}
  #allocation0 [shape = 'u32[]', space=smem, size = 0x4, offset = 0x4, fixed_abs, tag = 'smem constant byte address 0x4 - core index']
  #allocation1 [shape = 'u32[144,128]{1,0:T(1,128)}', space=vmem, size = 0x12000, scoped, tag = 'internal scratch']
  #allocation2 [shape = 'f32[1,1]{1,0:T(1,128)S(1)}', space=vmem, size = 0x200, scoped, tag = 'scoped memory for attention_block_forward.1']
  %s0 = inlined_call_operand.vmem [shape: f32[2,8,16], index: 0, kind: input, shape index: {}]
  %s1 = inlined_call_operand.vmem [shape: f32[16,32], index: 1, kind: input, shape index: {}]
  %s2 = inlined_call_operand.vmem [shape: f32[32,1], index: 2, kind: input, shape index: {}]
  %s3 = inlined_call_operand.<no memory space> [shape: f32[1,1], index: 3, kind: input, shape index: {}]
  %s4 = inlined_call_operand.vmem [shape: bf16[16,96], index: 4, kind: input, shape index: {}]
  %s5 = inlined_call_operand.vmem [shape: f32[1,96], index: 5, kind: input, shape index: {}]
  %s6 = inlined_call_operand.hbm [shape: f32[2,8,32], index: 6, kind: output, shape index: {}]
  %s7 = sld [smem:[#allocation0]]
  $region34: #{attention_block_forward.1} parent=0
    _
  %s9 = ssub.s32 1, %s7
  %s10 = scalar_select 0, %s9, %s7
  %v11 = vstv %s3
  %12 = vst [vmem:[#allocation2] sm:$0x1] %v11
  $region1: #{attention_block_forward.1} parent=0
    #allocation3 [shape = 'u8[8192]{0}', space=vmem, size = 0x2000, scoped, tag = 'output window, operand 0, single buffered']
    #allocation4 [shape = 's32[1]{0}', space=sflag, size = 0x4, scoped, tag = 'scoped memory for attention_block_forward.1']
    %13 = vsyncpa [#allocation4], 0
    // Predicated region
    $region2: #{attention_block_forward.1} parent=1 // pred_check
      _
    $region3: #{attention_block_forward.1} parent=1 // pred_check_branch
      %15 = sbr.rel (0) target = $region5
    $region4: #{attention_block_forward.1} parent=1 // pred_region
      _
    $region5: #{attention_block_forward.1} parent=1 // pred_fallthru
      _
    // Predicated region
    $region6: #{attention_block_forward.1} parent=1 // pred_check
      _
    $region7: #{attention_block_forward.1} parent=1 // pred_check_branch
      %17 = sbr.rel (0) target = $region9
    $region8: #{attention_block_forward.1} parent=1 // pred_region
      _
    $region9: #{attention_block_forward.1} parent=1 // pred_fallthru
      _
    // Predicated region
    $region10: #{attention_block_forward.1} parent=1 // pred_check
      _
    $region11: #{attention_block_forward.1} parent=1 // pred_check_branch
      %19 = sbr.rel (0) target = $region13
    $region12: #{attention_block_forward.1} parent=1 // pred_region
      _
    $region13: #{attention_block_forward.1} parent=1 // pred_fallthru
      _
    // Predicated region
    $region14: #{attention_block_forward.1} parent=1 // pred_check
      _
    $region15: #{attention_block_forward.1} parent=1 // pred_check_branch
      %21 = sbr.rel (0) target = $region17
    $region16: #{attention_block_forward.1} parent=1 // pred_region
      _
    $region17: #{attention_block_forward.1} parent=1 // pred_fallthru
      _
    // Predicated region
    $region18: #{attention_block_forward.1} parent=1 // pred_check
      _
    $region19: #{attention_block_forward.1} parent=1 // pred_check_branch
      %23 = sbr.rel (0) target = $region21
    $region20: #{attention_block_forward.1} parent=1 // pred_region
      _
    $region21: #{attention_block_forward.1} parent=1 // pred_fallthru
      _
    // Predicated region
    $region22: #{attention_block_forward.1} parent=1 // pred_check
      _
    $region23: #{attention_block_forward.1} parent=1 // pred_check_branch
      %25 = sbr.rel (0) target = $region25
    $region24: #{attention_block_forward.1} parent=1 // pred_region
      _
    $region25: #{attention_block_forward.1} parent=1 // pred_fallthru
      _
    %v27 = vld [vmem:[%s0] sm:$0xff]
    %v28 = vld [vmem:[%s0 + $0x8] sm:$0xff]
    %v29 = vld [vmem:[%s1] sm:$0xff]
    %v30 = vld [vmem:[%s1 + $0x8] sm:$0xff]
    %vm31 = vcmask 130048
    %v33 = vsel %vm31, %v27, 0
    %v36 = vsel %vm31, %v28, 0
    %38 = vmatprep.subr.mxu0 0.0
    %39 = vmatpush1.msra.mxu0 0.0
    %40 = vmatprep.subr.mxu0 0.0
    %41 = vmatpush1.msra.mxu0 0.0
    %42 = vmatprep.subr.mxu0 0.0
    %43 = vmatpush1.msra.mxu0 0.0
    %44 = vmatprep.subr.mxu0 0.0
    %45 = vmatpush1.msra.mxu0 0.0
    %46 = vmatprep.subr.mxu0 0.0
    %47 = vmatpush1.msra.mxu0 0.0
    %48 = vmatprep.subr.mxu0 0.0
    %49 = vmatpush1.msra.mxu0 0.0
    %50 = vmatprep.subr.mxu0 0.0
    %51 = vmatpush1.msra.mxu0 0.0
    %52 = vmatprep.subr.mxu0 0.0
    %53 = vmatpush1.msra.mxu0 0.0
    %54 = vmatprep.subr.mxu0 0.0
    %55 = vmatpush1.msra.mxu0 0.0
    %56 = vmatprep.subr.mxu0 0.0
    %57 = vmatpush1.msra.mxu0 0.0
    %58 = vmatprep.subr.mxu0 0.0
    %59 = vmatpush1.msra.mxu0 0.0
    %60 = vmatprep.subr.mxu0 0.0
    %61 = vmatpush1.msra.mxu0 0.0
    %62 = vmatprep.subr.mxu0 0.0
    %63 = vmatpush1.msra.mxu0 0.0
    %64 = vmatprep.subr.mxu0 0.0
    %65 = vmatpush1.msra.mxu0 0.0
    %66 = vmatprep.subr.mxu0 0.0
    %67 = vmatpush1.msra.mxu0 %v30
    %68 = vmatprep.subr.mxu0 0.0
    %69 = vmatpush1.msra.mxu0 %v29
    %70 = vmatprep.subr.mxu0 0.0
    %71 = vmatpush2.msra.mxu0 0.0
    %72 = vmatprep.subr.mxu0 0.0
    %73 = vmatpush2.msra.mxu0 0.0
    %74 = vmatprep.subr.mxu0 0.0
    %75 = vmatpush2.msra.mxu0 0.0
    %76 = vmatprep.subr.mxu0 0.0
    %77 = vmatpush2.msra.mxu0 0.0
    %78 = vmatprep.subr.mxu0 0.0
    %79 = vmatpush2.msra.mxu0 0.0
    %80 = vmatprep.subr.mxu0 0.0
    %81 = vmatpush2.msra.mxu0 0.0
    %82 = vmatprep.subr.mxu0 0.0
    %83 = vmatpush2.msra.mxu0 0.0
    %84 = vmatprep.subr.mxu0 0.0
    %85 = vmatpush2.msra.mxu0 0.0
    %86 = vmatprep.subr.mxu0 0.0
    %87 = vmatpush2.msra.mxu0 0.0
    %88 = vmatprep.subr.mxu0 0.0
    %89 = vmatpush2.msra.mxu0 0.0
    %90 = vmatprep.subr.mxu0 0.0
    %91 = vmatpush2.msra.mxu0 0.0
    %92 = vmatprep.subr.mxu0 0.0
    %93 = vmatpush2.msra.mxu0 0.0
    %94 = vmatprep.subr.mxu0 0.0
    %95 = vmatpush2.msra.mxu0 0.0
    %96 = vmatprep.subr.mxu0 0.0
    %97 = vmatpush2.msra.mxu0 0.0
    %98 = vmatprep.subr.mxu0 0.0
    %99 = vmatpush2.msra.mxu0 0.0
    %100 = vmatprep.subr.mxu0 0.0
    %101 = vmatpush2.msra.mxu0 0.0
    %102 = vmatprep.mubr.f32.mxu0 0.0
    %103 = vmatmul.mubr.f32.gmra.mxu0 %v33
    %v104 = vpop.f32.mrf.mxu0
    %v105 = vadd.f32 0.0, %v104
    %v106 = vpop.f32.mrf.mxu0
    %107 = vmatprep.mubr.f32.mxu0 0.0
    %108 = vmatmul.mubr.f32.gmra.mxu0 %v36
    %v109 = vpop.f32.mrf.mxu0
    %v110 = vadd.f32 0.0, %v109
    %v111 = vpop.f32.mrf.mxu0
    %112 = vdwg.mxu0
    %v113 = vmax.f32 %v105, 0.0
    %v114 = vmax.f32 %v110, 0.0
    %v115 = vld [vmem:[%s2] sm:$0xff]
    %v116 = vld [vmem:[%s2 + $0x8] sm:$0xff]
    %v117 = vld [vmem:[%s2 + $0x10] sm:$0xff]
    %v118 = vld [vmem:[%s2 + $0x18] sm:$0xff]
    %v119 = vld [vmem:[#allocation2] sm:$0x1]
    %v121 = vlaneseq
    %v122 = vshrl.u32 %v121, 7
    %v123 = vsub.s32 0, %v122
    %v124 = vrot.slane %v119, %v123
    %vm126 = vcmask 261120
    %v128 = vsel %vm126, %v113, 0
    %v131 = vsel %vm126, %v114, 0
    %133 = vmatprep.subr.mxu0 0.0
    %134 = vmatpush1.msra.mxu0 0.0
    %135 = vmatprep.subr.mxu0 0.0
    %136 = vmatpush1.msra.mxu0 0.0
    %137 = vmatprep.subr.mxu0 0.0
    %138 = vmatpush1.msra.mxu0 0.0
    %139 = vmatprep.subr.mxu0 0.0
    %140 = vmatpush1.msra.mxu0 0.0
    %141 = vmatprep.subr.mxu0 0.0
    %142 = vmatpush1.msra.mxu0 0.0
    %143 = vmatprep.subr.mxu0 0.0
    %144 = vmatpush1.msra.mxu0 0.0
    %145 = vmatprep.subr.mxu0 0.0
    %146 = vmatpush1.msra.mxu0 0.0
    %147 = vmatprep.subr.mxu0 0.0
    %148 = vmatpush1.msra.mxu0 0.0
    %149 = vmatprep.subr.mxu0 0.0
    %150 = vmatpush1.msra.mxu0 0.0
    %151 = vmatprep.subr.mxu0 0.0
    %152 = vmatpush1.msra.mxu0 0.0
    %153 = vmatprep.subr.mxu0 0.0
    %154 = vmatpush1.msra.mxu0 0.0
    %155 = vmatprep.subr.mxu0 0.0
    %156 = vmatpush1.msra.mxu0 0.0
    %157 = vmatprep.subr.mxu0 0.0
    %158 = vmatpush1.msra.mxu0 %v118
    %159 = vmatprep.subr.mxu0 0.0
    %160 = vmatpush1.msra.mxu0 %v117
    %161 = vmatprep.subr.mxu0 0.0
    %162 = vmatpush1.msra.mxu0 %v116
    %163 = vmatprep.subr.mxu0 0.0
    %164 = vmatpush1.msra.mxu0 %v115
    %165 = vmatprep.subr.mxu0 0.0
    %166 = vmatpush2.msra.mxu0 0.0
    %167 = vmatprep.subr.mxu0 0.0
    %168 = vmatpush2.msra.mxu0 0.0
    %169 = vmatprep.subr.mxu0 0.0
    %170 = vmatpush2.msra.mxu0 0.0
    %171 = vmatprep.subr.mxu0 0.0
    %172 = vmatpush2.msra.mxu0 0.0
    %173 = vmatprep.subr.mxu0 0.0
    %174 = vmatpush2.msra.mxu0 0.0
    %175 = vmatprep.subr.mxu0 0.0
    %176 = vmatpush2.msra.mxu0 0.0
    %177 = vmatprep.subr.mxu0 0.0
    %178 = vmatpush2.msra.mxu0 0.0
    %179 = vmatprep.subr.mxu0 0.0
    %180 = vmatpush2.msra.mxu0 0.0
    %181 = vmatprep.subr.mxu0 0.0
    %182 = vmatpush2.msra.mxu0 0.0
    %183 = vmatprep.subr.mxu0 0.0
    %184 = vmatpush2.msra.mxu0 0.0
    %185 = vmatprep.subr.mxu0 0.0
    %186 = vmatpush2.msra.mxu0 0.0
    %187 = vmatprep.subr.mxu0 0.0
    %188 = vmatpush2.msra.mxu0 0.0
    %189 = vmatprep.subr.mxu0 0.0
    %190 = vmatpush2.msra.mxu0 0.0
    %191 = vmatprep.subr.mxu0 0.0
    %192 = vmatpush2.msra.mxu0 0.0
    %193 = vmatprep.subr.mxu0 0.0
    %194 = vmatpush2.msra.mxu0 0.0
    %195 = vmatprep.subr.mxu0 0.0
    %196 = vmatpush2.msra.mxu0 0.0
    %197 = vmatprep.mubr.f32.mxu0 0.0
    %198 = vmatmul.mubr.f32.gmra.mxu0 %v128
    %v199 = vpop.f32.mrf.mxu0
    %v200 = vadd.f32 %v124, %v199
    %v201 = vpop.f32.mrf.mxu0
    %202 = vmatprep.mubr.f32.mxu0 0.0
    %203 = vmatmul.mubr.f32.gmra.mxu0 %v131
    %v204 = vpop.f32.mrf.mxu0
    %v205 = vadd.f32 %v124, %v204
    %v206 = vpop.f32.mrf.mxu0
    %207 = vdwg.mxu0
    %v208 = vxor.u32 %v200, 2147483648
    %v209 = vxor.u32 %v205, 2147483648
    %v210 = vmul.f32 %v208, 1.442695
    %v211 = vpow.pop %v210
    %v212 = vmul.f32 %v209, 1.442695
    %v213 = vpow.pop %v212
    %v214 = vadd.f32 %v211, 1.0
    %v215 = vadd.f32 %v213, 1.0
    %v216 = vrcp.pop %v214
    %v217 = vmul.f32 1.0, %v216
    %v218 = vrcp.pop %v215
    %v219 = vmul.f32 1.0, %v218
    %v220 = vmul.f32 %v217, 8.0
    %v221 = vmul.f32 %v219, 8.0
    %v222 = vpack.c.bf16 %v28, %v27
    %v223 = vld [vmem:[%s4] sm:$0xf]
    %v224 = vld [vmem:[%s4 + $0x4] sm:$0xf]
    %v225 = vld [vmem:[%s5] sm:$0x1]
    %v227 = vlaneseq
    %v228 = vshrl.u32 %v227, 7
    %v229 = vsub.s32 0, %v228
    %v230 = vrot.slane %v225, %v229
    %v234 = vunpack.c.l.b16 %v223
    %v235 = vunpack.c.l.b16 %v224
    %v236 = vpack.c.b16 %v235, %v234
    %v239 = vsel %vm31, %v222, 0
    %241 = vmatprep.subr.bf16.mxu0 0
    %242 = vmatpush1.bf16.msra.mxu0 0
    %243 = vmatprep.subr.bf16.mxu0 0
    %244 = vmatpush1.bf16.msra.mxu0 0
    %245 = vmatprep.subr.bf16.mxu0 0
    %246 = vmatpush1.bf16.msra.mxu0 0
    %247 = vmatprep.subr.bf16.mxu0 0
    %248 = vmatpush1.bf16.msra.mxu0 0
    %249 = vmatprep.subr.bf16.mxu0 0
    %250 = vmatpush1.bf16.msra.mxu0 0
    %251 = vmatprep.subr.bf16.mxu0 0
    %252 = vmatpush1.bf16.msra.mxu0 0
    %253 = vmatprep.subr.bf16.mxu0 0
    %254 = vmatpush1.bf16.msra.mxu0 0
    %255 = vmatprep.subr.bf16.mxu0 0
    %256 = vmatpush1.bf16.msra.mxu0 %v236
    %257 = vmatprep.subr.bf16.mxu0 0
    %258 = vmatpush2.bf16.msra.mxu0 0
    %259 = vmatprep.subr.bf16.mxu0 0
    %260 = vmatpush2.bf16.msra.mxu0 0
    %261 = vmatprep.subr.bf16.mxu0 0
    %262 = vmatpush2.bf16.msra.mxu0 0
    %263 = vmatprep.subr.bf16.mxu0 0
    %264 = vmatpush2.bf16.msra.mxu0 0
    %265 = vmatprep.subr.bf16.mxu0 0
    %266 = vmatpush2.bf16.msra.mxu0 0
    %267 = vmatprep.subr.bf16.mxu0 0
    %268 = vmatpush2.bf16.msra.mxu0 0
    %269 = vmatprep.subr.bf16.mxu0 0
    %270 = vmatpush2.bf16.msra.mxu0 0
    %271 = vmatprep.subr.bf16.mxu0 0
    %272 = vmatpush2.bf16.msra.mxu0 0
    %273 = vmatprep.mubr.bf16.mxu0 0
    %274 = vmatmul.mubr.bf16.gmra.mxu0 %v239
    %v275 = vpop.f32.mrf.mxu0
    %v276 = vadd.f32 %v230, %v275
    %v277 = vpop.f32.mrf.mxu0
    %v278 = vpop.f32.mrf.mxu0
    %v279 = vadd.f32 %v230, %v278
    %v280 = vpop.f32.mrf.mxu0
    %281 = vdwg.mxu0
    %v282 = vpack.c.bf16 %v276, %v276
    %v283 = vpack.c.bf16 %v279, %v279
    %v284 = vlaneseq
    %v285 = vshrl.u32 %v284, 7
    %v286 = vlaneseq
    %v287 = vand.u32 %v286, 127
    %vm288 = vcmp.lt.s32.totalorder %v287, %v285
    %v289 = vsub.s32 %v287, %v285
    %v290 = vcvt.s32.f32 %v289
    %292 = vrot.lane.b32.xlu0 %v282, 96
    %v293 = vpop.permute.xlu0 %292
    %v295 = vsel %vm31, %v282, 0
    %v298 = vsel %vm31, %v293, 0
    %300 = vmatprep.subr.bf16.mxu0 0
    %301 = vmatpush1.bf16.xpose.msra.mxu0 0
    %302 = vmatprep.subr.bf16.mxu0 0
    %303 = vmatpush1.bf16.xpose.msra.mxu0 0
    %304 = vmatprep.subr.bf16.mxu0 0
    %305 = vmatpush1.bf16.xpose.msra.mxu0 0
    %306 = vmatprep.subr.bf16.mxu0 0
    %307 = vmatpush1.bf16.xpose.msra.mxu0 0
    %308 = vmatprep.subr.bf16.mxu0 0
    %309 = vmatpush1.bf16.xpose.msra.mxu0 0
    %310 = vmatprep.subr.bf16.mxu0 0
    %311 = vmatpush1.bf16.xpose.msra.mxu0 0
    %312 = vmatprep.subr.bf16.mxu0 0
    %313 = vmatpush1.bf16.xpose.msra.mxu0 0
    %314 = vmatprep.subr.bf16.mxu0 0
    %315 = vmatpush1.bf16.xpose.msra.mxu0 %v298
    %316 = vmatprep.subr.bf16.mxu0 0
    %317 = vmatpush2.bf16.xpose.msra.mxu0 0
    %318 = vmatprep.subr.bf16.mxu0 0
    %319 = vmatpush2.bf16.xpose.msra.mxu0 0
    %320 = vmatprep.subr.bf16.mxu0 0
    %321 = vmatpush2.bf16.xpose.msra.mxu0 0
    %322 = vmatprep.subr.bf16.mxu0 0
    %323 = vmatpush2.bf16.xpose.msra.mxu0 0
    %324 = vmatprep.subr.bf16.mxu0 0
    %325 = vmatpush2.bf16.xpose.msra.mxu0 0
    %326 = vmatprep.subr.bf16.mxu0 0
    %327 = vmatpush2.bf16.xpose.msra.mxu0 0
    %328 = vmatprep.subr.bf16.mxu0 0
    %329 = vmatpush2.bf16.xpose.msra.mxu0 0
    %330 = vmatprep.subr.bf16.mxu0 0
    %331 = vmatpush2.bf16.xpose.msra.mxu0 0
    %332 = vmatprep.mubr.bf16.mxu0 0
    %333 = vmatmul.mubr.bf16.gmra.mxu0 %v295
    %v334 = vpop.f32.mrf.mxu0
    %v335 = vadd.f32 0.0, %v334
    %v336 = vpop.f32.mrf.mxu0
    %v337 = vpop.f32.mrf.mxu0
    %v338 = vpop.f32.mrf.mxu0
    %339 = vdwg.mxu0
    %341 = vrot.lane.b32.xlu0 %v283, 96
    %v342 = vpop.permute.xlu0 %341
    %v344 = vsel %vm31, %v283, 0
    %v347 = vsel %vm31, %v342, 0
    %349 = vmatprep.subr.bf16.mxu0 0
    %350 = vmatpush1.bf16.xpose.msra.mxu0 0
    %351 = vmatprep.subr.bf16.mxu0 0
    %352 = vmatpush1.bf16.xpose.msra.mxu0 0
    %353 = vmatprep.subr.bf16.mxu0 0
    %354 = vmatpush1.bf16.xpose.msra.mxu0 0
    %355 = vmatprep.subr.bf16.mxu0 0
    %356 = vmatpush1.bf16.xpose.msra.mxu0 0
    %357 = vmatprep.subr.bf16.mxu0 0
    %358 = vmatpush1.bf16.xpose.msra.mxu0 0
    %359 = vmatprep.subr.bf16.mxu0 0
    %360 = vmatpush1.bf16.xpose.msra.mxu0 0
    %361 = vmatprep.subr.bf16.mxu0 0
    %362 = vmatpush1.bf16.xpose.msra.mxu0 0
    %363 = vmatprep.subr.bf16.mxu0 0
    %364 = vmatpush1.bf16.xpose.msra.mxu0 %v347
    %365 = vmatprep.subr.bf16.mxu0 0
    %366 = vmatpush2.bf16.xpose.msra.mxu0 0
    %367 = vmatprep.subr.bf16.mxu0 0
    %368 = vmatpush2.bf16.xpose.msra.mxu0 0
    %369 = vmatprep.subr.bf16.mxu0 0
    %370 = vmatpush2.bf16.xpose.msra.mxu0 0
    %371 = vmatprep.subr.bf16.mxu0 0
    %372 = vmatpush2.bf16.xpose.msra.mxu0 0
    %373 = vmatprep.subr.bf16.mxu0 0
    %374 = vmatpush2.bf16.xpose.msra.mxu0 0
    %375 = vmatprep.subr.bf16.mxu0 0
    %376 = vmatpush2.bf16.xpose.msra.mxu0 0
    %377 = vmatprep.subr.bf16.mxu0 0
    %378 = vmatpush2.bf16.xpose.msra.mxu0 0
    %379 = vmatprep.subr.bf16.mxu0 0
    %380 = vmatpush2.bf16.xpose.msra.mxu0 0
    %381 = vmatprep.mubr.bf16.mxu0 0
    %382 = vmatmul.mubr.bf16.gmra.mxu0 %v344
    %v383 = vpop.f32.mrf.mxu0
    %v384 = vadd.f32 0.0, %v383
    %v385 = vpop.f32.mrf.mxu0
    %v386 = vpop.f32.mrf.mxu0
    %v387 = vpop.f32.mrf.mxu0
    %388 = vdwg.mxu0
    %v389 = vmul.f32 %v335, 0.35355338
    %v390 = vmul.f32 %v384, 0.35355338
    %v391 = vadd.f32 %v220, 2.0
    %v392 = vadd.f32 %v221, 2.0
    %394 = vset.pattern.permute.xlu0 0
    %395 = vperm.xlu0 %394, %v391
    %v396 = vpop.permute.xlu0 %395
    %399 = vset.pattern.permute.xlu0 0
    %400 = vperm.xlu0 %399, %v392
    %v401 = vpop.permute.xlu0 %400
    %vm403 = vcmp.gt.f32.partialorder %v290, %v396
    %vm404 = vcmp.gt.f32.partialorder %v290, %v401
    %v405 = vsel %vm288, 1, 0
    %vm406 = vcmp.eq.s32.totalorder %v405, 1
    %vm407 = vmor %vm406, %vm403
    %vm408 = vmor %vm406, %vm404
    %v409 = vsub.f32 %v389, 1e+18
    %v410 = vsub.f32 %v390, 1e+18
    %v411 = vadd.f32 %v389, %v389
    %v412 = vadd.f32 %v390, %v390
    %v413 = vsel %vm407, %v409, %v411
    %v414 = vsel %vm408, %v410, %v412
    %vm415 = vcmask 64512
    %v416 = vsel %vm415, %v413, -inf
    %417 = vmax.xlane.f32.xlu0 %v416
    %v418 = vpop.xlane.xlu0 %417
    %v419 = vsel %vm415, %v414, -inf
    %420 = vmax.xlane.f32.xlu0 %v419
    %v421 = vpop.xlane.xlu0 %420
    %v422 = vsub.f32 %v413, %v418
    %v423 = vsub.f32 %v414, %v421
    %v424 = vmul.f32 %v422, 1.442695
    %v425 = vpow.pop %v424
    %v426 = vmul.f32 %v423, 1.442695
    %v427 = vpow.pop %v426
    %v428 = vsel %vm415, %v425, 0.0
    %429 = vadd.xlane.f32.xlu0 %v428
    %v430 = vpop.xlane.xlu0 %429
    %v431 = vsel %vm415, %v427, 0.0
    %432 = vadd.xlane.f32.xlu0 %v431
    %v433 = vpop.xlane.xlu0 %432
    %v434 = vpack.c.bf16 %v425, %v425
    %v435 = vpack.c.bf16 %v427, %v427
    %436 = vrot.lane.b32.xlu0 %v282, 64
    %v437 = vpop.permute.xlu0 %436
    %v439 = vsel %vm415, %v434, 0
    %vm441 = vcmask 1043456
    %v443 = vsel %vm441, %v437, 0
    %445 = vmatprep.subr.bf16.mxu0 0
    %446 = vmatpush1.bf16.msra.mxu0 0
    %447 = vmatprep.subr.bf16.mxu0 0
    %448 = vmatpush1.bf16.msra.mxu0 0
    %449 = vmatprep.subr.bf16.mxu0 0
    %450 = vmatpush1.bf16.msra.mxu0 0
    %451 = vmatprep.subr.bf16.mxu0 0
    %452 = vmatpush1.bf16.msra.mxu0 0
    %453 = vmatprep.subr.bf16.mxu0 0
    %454 = vmatpush1.bf16.msra.mxu0 0
    %455 = vmatprep.subr.bf16.mxu0 0
    %456 = vmatpush1.bf16.msra.mxu0 0
    %457 = vmatprep.subr.bf16.mxu0 0
    %458 = vmatpush1.bf16.msra.mxu0 0
    %459 = vmatprep.subr.bf16.mxu0 0
    %460 = vmatpush1.bf16.msra.mxu0 %v443
    %461 = vmatprep.subr.bf16.mxu0 0
    %462 = vmatpush2.bf16.msra.mxu0 0
    %463 = vmatprep.subr.bf16.mxu0 0
    %464 = vmatpush2.bf16.msra.mxu0 0
    %465 = vmatprep.subr.bf16.mxu0 0
    %466 = vmatpush2.bf16.msra.mxu0 0
    %467 = vmatprep.subr.bf16.mxu0 0
    %468 = vmatpush2.bf16.msra.mxu0 0
    %469 = vmatprep.subr.bf16.mxu0 0
    %470 = vmatpush2.bf16.msra.mxu0 0
    %471 = vmatprep.subr.bf16.mxu0 0
    %472 = vmatpush2.bf16.msra.mxu0 0
    %473 = vmatprep.subr.bf16.mxu0 0
    %474 = vmatpush2.bf16.msra.mxu0 0
    %475 = vmatprep.subr.bf16.mxu0 0
    %476 = vmatpush2.bf16.msra.mxu0 0
    %477 = vmatprep.mubr.bf16.mxu0 0
    %478 = vmatmul.mubr.bf16.gmra.mxu0 %v439
    %v479 = vpop.f32.mrf.mxu0
    %v480 = vadd.f32 0.0, %v479
    %v481 = vpop.f32.mrf.mxu0
    %v482 = vpop.f32.mrf.mxu0
    %v483 = vpop.f32.mrf.mxu0
    %484 = vdwg.mxu0
    %485 = vrot.lane.b32.xlu0 %v283, 64
    %v486 = vpop.permute.xlu0 %485
    %v488 = vsel %vm415, %v435, 0
    %v491 = vsel %vm441, %v486, 0
    %493 = vmatprep.subr.bf16.mxu0 0
    %494 = vmatpush1.bf16.msra.mxu0 0
    %495 = vmatprep.subr.bf16.mxu0 0
    %496 = vmatpush1.bf16.msra.mxu0 0
    %497 = vmatprep.subr.bf16.mxu0 0
    %498 = vmatpush1.bf16.msra.mxu0 0
    %499 = vmatprep.subr.bf16.mxu0 0
    %500 = vmatpush1.bf16.msra.mxu0 0
    %501 = vmatprep.subr.bf16.mxu0 0
    %502 = vmatpush1.bf16.msra.mxu0 0
    %503 = vmatprep.subr.bf16.mxu0 0
    %504 = vmatpush1.bf16.msra.mxu0 0
    %505 = vmatprep.subr.bf16.mxu0 0
    %506 = vmatpush1.bf16.msra.mxu0 0
    %507 = vmatprep.subr.bf16.mxu0 0
    %508 = vmatpush1.bf16.msra.mxu0 %v491
    %509 = vmatprep.subr.bf16.mxu0 0
    %510 = vmatpush2.bf16.msra.mxu0 0
    %511 = vmatprep.subr.bf16.mxu0 0
    %512 = vmatpush2.bf16.msra.mxu0 0
    %513 = vmatprep.subr.bf16.mxu0 0
    %514 = vmatpush2.bf16.msra.mxu0 0
    %515 = vmatprep.subr.bf16.mxu0 0
    %516 = vmatpush2.bf16.msra.mxu0 0
    %517 = vmatprep.subr.bf16.mxu0 0
    %518 = vmatpush2.bf16.msra.mxu0 0
    %519 = vmatprep.subr.bf16.mxu0 0
    %520 = vmatpush2.bf16.msra.mxu0 0
    %521 = vmatprep.subr.bf16.mxu0 0
    %522 = vmatpush2.bf16.msra.mxu0 0
    %523 = vmatprep.subr.bf16.mxu0 0
    %524 = vmatpush2.bf16.msra.mxu0 0
    %525 = vmatprep.mubr.bf16.mxu0 0
    %526 = vmatmul.mubr.bf16.gmra.mxu0 %v488
    %v527 = vpop.f32.mrf.mxu0
    %v528 = vadd.f32 0.0, %v527
    %v529 = vpop.f32.mrf.mxu0
    %v530 = vpop.f32.mrf.mxu0
    %v531 = vpop.f32.mrf.mxu0
    %532 = vdwg.mxu0
    %v533 = vrcp.pop %v430
    %v534 = vrcp.pop %v433
    %v535 = vmul.f32 %v480, %v533
    %v536 = vmul.f32 %v528, %v534
    %537 = vst.msk [vmem:[#allocation3] sm:$0xff] %vm31, %v535
    %538 = vst.msk [vmem:[#allocation3 + $0x8] sm:$0xff] %vm31, %v536
    %539 = vrot.lane.b32.xlu0 %v282, 112
    %v540 = vpop.permute.xlu0 %539
    %541 = vrot.lane.b32.xlu0 %v282, 80
    %v542 = vpop.permute.xlu0 %541
    %v544 = vsel %vm31, %v540, 0
    %v547 = vsel %vm31, %v542, 0
    %549 = vmatprep.subr.bf16.mxu0 0
    %550 = vmatpush1.bf16.xpose.msra.mxu0 0
    %551 = vmatprep.subr.bf16.mxu0 0
    %552 = vmatpush1.bf16.xpose.msra.mxu0 0
    %553 = vmatprep.subr.bf16.mxu0 0
    %554 = vmatpush1.bf16.xpose.msra.mxu0 0
    %555 = vmatprep.subr.bf16.mxu0 0
    %556 = vmatpush1.bf16.xpose.msra.mxu0 0
    %557 = vmatprep.subr.bf16.mxu0 0
    %558 = vmatpush1.bf16.xpose.msra.mxu0 0
    %559 = vmatprep.subr.bf16.mxu0 0
    %560 = vmatpush1.bf16.xpose.msra.mxu0 0
    %561 = vmatprep.subr.bf16.mxu0 0
    %562 = vmatpush1.bf16.xpose.msra.mxu0 0
    %563 = vmatprep.subr.bf16.mxu0 0
    %564 = vmatpush1.bf16.xpose.msra.mxu0 %v547
    %565 = vmatprep.subr.bf16.mxu0 0
    %566 = vmatpush2.bf16.xpose.msra.mxu0 0
    %567 = vmatprep.subr.bf16.mxu0 0
    %568 = vmatpush2.bf16.xpose.msra.mxu0 0
    %569 = vmatprep.subr.bf16.mxu0 0
    %570 = vmatpush2.bf16.xpose.msra.mxu0 0
    %571 = vmatprep.subr.bf16.mxu0 0
    %572 = vmatpush2.bf16.xpose.msra.mxu0 0
    %573 = vmatprep.subr.bf16.mxu0 0
    %574 = vmatpush2.bf16.xpose.msra.mxu0 0
    %575 = vmatprep.subr.bf16.mxu0 0
    %576 = vmatpush2.bf16.xpose.msra.mxu0 0
    %577 = vmatprep.subr.bf16.mxu0 0
    %578 = vmatpush2.bf16.xpose.msra.mxu0 0
    %579 = vmatprep.subr.bf16.mxu0 0
    %580 = vmatpush2.bf16.xpose.msra.mxu0 0
    %581 = vmatprep.mubr.bf16.mxu0 0
    %582 = vmatmul.mubr.bf16.gmra.mxu0 %v544
    %v583 = vpop.f32.mrf.mxu0
    %v584 = vadd.f32 0.0, %v583
    %v585 = vpop.f32.mrf.mxu0
    %v586 = vpop.f32.mrf.mxu0
    %v587 = vpop.f32.mrf.mxu0
    %588 = vdwg.mxu0
    %589 = vrot.lane.b32.xlu0 %v283, 112
    %v590 = vpop.permute.xlu0 %589
    %591 = vrot.lane.b32.xlu0 %v283, 80
    %v592 = vpop.permute.xlu0 %591
    %v594 = vsel %vm31, %v590, 0
    %v597 = vsel %vm31, %v592, 0
    %599 = vmatprep.subr.bf16.mxu0 0
    %600 = vmatpush1.bf16.xpose.msra.mxu0 0
    %601 = vmatprep.subr.bf16.mxu0 0
    %602 = vmatpush1.bf16.xpose.msra.mxu0 0
    %603 = vmatprep.subr.bf16.mxu0 0
    %604 = vmatpush1.bf16.xpose.msra.mxu0 0
    %605 = vmatprep.subr.bf16.mxu0 0
    %606 = vmatpush1.bf16.xpose.msra.mxu0 0
    %607 = vmatprep.subr.bf16.mxu0 0
    %608 = vmatpush1.bf16.xpose.msra.mxu0 0
    %609 = vmatprep.subr.bf16.mxu0 0
    %610 = vmatpush1.bf16.xpose.msra.mxu0 0
    %611 = vmatprep.subr.bf16.mxu0 0
    %612 = vmatpush1.bf16.xpose.msra.mxu0 0
    %613 = vmatprep.subr.bf16.mxu0 0
    %614 = vmatpush1.bf16.xpose.msra.mxu0 %v597
    %615 = vmatprep.subr.bf16.mxu0 0
    %616 = vmatpush2.bf16.xpose.msra.mxu0 0
    %617 = vmatprep.subr.bf16.mxu0 0
    %618 = vmatpush2.bf16.xpose.msra.mxu0 0
    %619 = vmatprep.subr.bf16.mxu0 0
    %620 = vmatpush2.bf16.xpose.msra.mxu0 0
    %621 = vmatprep.subr.bf16.mxu0 0
    %622 = vmatpush2.bf16.xpose.msra.mxu0 0
    %623 = vmatprep.subr.bf16.mxu0 0
    %624 = vmatpush2.bf16.xpose.msra.mxu0 0
    %625 = vmatprep.subr.bf16.mxu0 0
    %626 = vmatpush2.bf16.xpose.msra.mxu0 0
    %627 = vmatprep.subr.bf16.mxu0 0
    %628 = vmatpush2.bf16.xpose.msra.mxu0 0
    %629 = vmatprep.subr.bf16.mxu0 0
    %630 = vmatpush2.bf16.xpose.msra.mxu0 0
    %631 = vmatprep.mubr.bf16.mxu0 0
    %632 = vmatmul.mubr.bf16.gmra.mxu0 %v594
    %v633 = vpop.f32.mrf.mxu0
    %v634 = vadd.f32 0.0, %v633
    %v635 = vpop.f32.mrf.mxu0
    %v636 = vpop.f32.mrf.mxu0
    %v637 = vpop.f32.mrf.mxu0
    %638 = vdwg.mxu0
    %v639 = vmul.f32 %v584, 0.35355338
    %v640 = vmul.f32 %v634, 0.35355338
    %v641 = vadd.f32 %v220, 4.0
    %v642 = vadd.f32 %v221, 4.0
    %644 = vset.pattern.permute.xlu0 0
    %645 = vperm.xlu0 %644, %v641
    %v646 = vpop.permute.xlu0 %645
    %649 = vset.pattern.permute.xlu0 0
    %650 = vperm.xlu0 %649, %v642
    %v651 = vpop.permute.xlu0 %650
    %vm653 = vcmp.gt.f32.partialorder %v290, %v646
    %vm654 = vcmp.gt.f32.partialorder %v290, %v651
    %vm655 = vmor %vm406, %vm653
    %vm656 = vmor %vm406, %vm654
    %v657 = vsub.f32 %v639, 1e+18
    %v658 = vsub.f32 %v640, 1e+18
    %v659 = vadd.f32 %v639, %v639
    %v660 = vadd.f32 %v640, %v640
    %v661 = vsel %vm655, %v657, %v659
    %v662 = vsel %vm656, %v658, %v660
    %v663 = vsel %vm415, %v661, -inf
    %664 = vmax.xlane.f32.xlu0 %v663
    %v665 = vpop.xlane.xlu0 %664
    %v666 = vsel %vm415, %v662, -inf
    %667 = vmax.xlane.f32.xlu0 %v666
    %v668 = vpop.xlane.xlu0 %667
    %v669 = vsub.f32 %v661, %v665
    %v670 = vsub.f32 %v662, %v668
    %v671 = vmul.f32 %v669, 1.442695
    %v672 = vpow.pop %v671
    %v673 = vmul.f32 %v670, 1.442695
    %v674 = vpow.pop %v673
    %v675 = vsel %vm415, %v672, 0.0
    %676 = vadd.xlane.f32.xlu0 %v675
    %v677 = vpop.xlane.xlu0 %676
    %v678 = vsel %vm415, %v674, 0.0
    %679 = vadd.xlane.f32.xlu0 %v678
    %v680 = vpop.xlane.xlu0 %679
    %v681 = vpack.c.bf16 %v672, %v672
    %v682 = vpack.c.bf16 %v674, %v674
    %683 = vrot.lane.b32.xlu0 %v282, 48
    %v684 = vpop.permute.xlu0 %683
    %v686 = vsel %vm415, %v681, 0
    %v689 = vsel %vm441, %v684, 0
    %691 = vmatprep.subr.bf16.mxu0 0
    %692 = vmatpush1.bf16.msra.mxu0 0
    %693 = vmatprep.subr.bf16.mxu0 0
    %694 = vmatpush1.bf16.msra.mxu0 0
    %695 = vmatprep.subr.bf16.mxu0 0
    %696 = vmatpush1.bf16.msra.mxu0 0
    %697 = vmatprep.subr.bf16.mxu0 0
    %698 = vmatpush1.bf16.msra.mxu0 0
    %699 = vmatprep.subr.bf16.mxu0 0
    %700 = vmatpush1.bf16.msra.mxu0 0
    %701 = vmatprep.subr.bf16.mxu0 0
    %702 = vmatpush1.bf16.msra.mxu0 0
    %703 = vmatprep.subr.bf16.mxu0 0
    %704 = vmatpush1.bf16.msra.mxu0 0
    %705 = vmatprep.subr.bf16.mxu0 0
    %706 = vmatpush1.bf16.msra.mxu0 %v689
    %707 = vmatprep.subr.bf16.mxu0 0
    %708 = vmatpush2.bf16.msra.mxu0 0
    %709 = vmatprep.subr.bf16.mxu0 0
    %710 = vmatpush2.bf16.msra.mxu0 0
    %711 = vmatprep.subr.bf16.mxu0 0
    %712 = vmatpush2.bf16.msra.mxu0 0
    %713 = vmatprep.subr.bf16.mxu0 0
    %714 = vmatpush2.bf16.msra.mxu0 0
    %715 = vmatprep.subr.bf16.mxu0 0
    %716 = vmatpush2.bf16.msra.mxu0 0
    %717 = vmatprep.subr.bf16.mxu0 0
    %718 = vmatpush2.bf16.msra.mxu0 0
    %719 = vmatprep.subr.bf16.mxu0 0
    %720 = vmatpush2.bf16.msra.mxu0 0
    %721 = vmatprep.subr.bf16.mxu0 0
    %722 = vmatpush2.bf16.msra.mxu0 0
    %723 = vmatprep.mubr.bf16.mxu0 0
    %724 = vmatmul.mubr.bf16.gmra.mxu0 %v686
    %v725 = vpop.f32.mrf.mxu0
    %v726 = vadd.f32 0.0, %v725
    %v727 = vpop.f32.mrf.mxu0
    %v728 = vpop.f32.mrf.mxu0
    %v729 = vpop.f32.mrf.mxu0
    %730 = vdwg.mxu0
    %731 = vrot.lane.b32.xlu0 %v283, 48
    %v732 = vpop.permute.xlu0 %731
    %v734 = vsel %vm415, %v682, 0
    %v737 = vsel %vm441, %v732, 0
    %739 = vmatprep.subr.bf16.mxu0 0
    %740 = vmatpush1.bf16.msra.mxu0 0
    %741 = vmatprep.subr.bf16.mxu0 0
    %742 = vmatpush1.bf16.msra.mxu0 0
    %743 = vmatprep.subr.bf16.mxu0 0
    %744 = vmatpush1.bf16.msra.mxu0 0
    %745 = vmatprep.subr.bf16.mxu0 0
    %746 = vmatpush1.bf16.msra.mxu0 0
    %747 = vmatprep.subr.bf16.mxu0 0
    %748 = vmatpush1.bf16.msra.mxu0 0
    %749 = vmatprep.subr.bf16.mxu0 0
    %750 = vmatpush1.bf16.msra.mxu0 0
    %751 = vmatprep.subr.bf16.mxu0 0
    %752 = vmatpush1.bf16.msra.mxu0 0
    %753 = vmatprep.subr.bf16.mxu0 0
    %754 = vmatpush1.bf16.msra.mxu0 %v737
    %755 = vmatprep.subr.bf16.mxu0 0
    %756 = vmatpush2.bf16.msra.mxu0 0
    %757 = vmatprep.subr.bf16.mxu0 0
    %758 = vmatpush2.bf16.msra.mxu0 0
    %759 = vmatprep.subr.bf16.mxu0 0
    %760 = vmatpush2.bf16.msra.mxu0 0
    %761 = vmatprep.subr.bf16.mxu0 0
    %762 = vmatpush2.bf16.msra.mxu0 0
    %763 = vmatprep.subr.bf16.mxu0 0
    %764 = vmatpush2.bf16.msra.mxu0 0
    %765 = vmatprep.subr.bf16.mxu0 0
    %766 = vmatpush2.bf16.msra.mxu0 0
    %767 = vmatprep.subr.bf16.mxu0 0
    %768 = vmatpush2.bf16.msra.mxu0 0
    %769 = vmatprep.subr.bf16.mxu0 0
    %770 = vmatpush2.bf16.msra.mxu0 0
    %771 = vmatprep.mubr.bf16.mxu0 0
    %772 = vmatmul.mubr.bf16.gmra.mxu0 %v734
    %v773 = vpop.f32.mrf.mxu0
    %v774 = vadd.f32 0.0, %v773
    %v775 = vpop.f32.mrf.mxu0
    %v776 = vpop.f32.mrf.mxu0
    %v777 = vpop.f32.mrf.mxu0
    %778 = vdwg.mxu0
    %v779 = vrcp.pop %v677
    %v780 = vrcp.pop %v680
    %v781 = vmul.f32 %v726, %v779
    %v782 = vmul.f32 %v774, %v780
    %785 = vrot.lane.b32.xlu0 %v781, 16
    %v786 = vpop.permute.xlu0 %785
    %787 = vrot.lane.b32.xlu0 %v782, 16
    %v788 = vpop.permute.xlu0 %787
    %vm791 = vcmask 261248
    %792 = vst.msk [vmem:[#allocation3] sm:$0xff] %vm791, %v786
    %793 = vst.msk [vmem:[#allocation3 + $0x8] sm:$0xff] %vm791, %v788
    // Predicated region
    $region26: #{attention_block_forward.1} parent=1 // pred_check
      _
    $region27: #{attention_block_forward.1} parent=1 // pred_check_branch
      %795 = sbr.rel (0) target = $region29
    $region28: #{attention_block_forward.1} parent=1 // pred_region
      %s797 = ssub.s32 256, 256
      %798 = vsyncadd [#allocation4], %s797
      %s799 = sshll.u32 [#allocation3], 4
      %s800 = int_to_ptr.vmem [resolvable:$true] %s799
      %805 = dma.vmem_to_hbm [thread:$0]  %s800, 256, %s6, [#allocation4], 128, 128, 8
    $region29: #{attention_block_forward.1} parent=1 // pred_fallthru
      _
    // Predicated region
    $region30: #{attention_block_forward.1} parent=1 // pred_check
      _
    $region31: #{attention_block_forward.1} parent=1 // pred_check_branch
      %807 = sbr.rel (0) target = $region33
    $region32: #{attention_block_forward.1} parent=1 // pred_region
      %808 = dma.done [#allocation4], 256
    $region33: #{attention_block_forward.1} parent=1 // pred_fallthru
      _
    %809 = vsyncpa [#allocation4], 1

</llo_original>
